<compile_context>
chip_gen: v5e
topology: v5e:2x2
jax: 0.10.0
libtpu: 0.0.40
codegen_flags: <defaults>
</compile_context>

<pallas_src>
import functools

import jax
import jax.numpy as jnp
from jax import lax
from jax.experimental import pallas as pl
from jax.experimental.pallas import tpu as pltpu


def _label_smoothing_kernel(x_ref, t_ref, out_ref, *, smoothing, num_classes,
                            block_rows, total_rows):
    confidence = 1.0 - smoothing
    pid = pl.program_id(0)

    x = x_ref[...].astype(jnp.float32)        # (TB, C) — cast once per tile
    t = t_ref[...]                            # (TB, 1) int32 class indices

    # Numerically stable log-sum-exp over the class (lane) axis.  x - m is
    # only formed transiently inside the exp reduction (no `shifted` temp).
    m = jnp.max(x, axis=-1, keepdims=True)                               # (TB, 1)
    lse = m + jnp.log(jnp.sum(jnp.exp(x - m), axis=-1, keepdims=True))   # (TB, 1)

    # Fused target-gather + smoothing reduction on the raw logits:
    #   loss_row = lse_full - sum_c[(smooth/C + conf*(c==t)) * x_c]
    # (uses confidence + smoothing == 1, so the max m cancels analytically).
    class_ids = lax.broadcasted_iota(jnp.int32, x.shape, 1)
    w = jnp.where(class_ids == t,
                  confidence + smoothing / num_classes,
                  smoothing / num_classes)
    wsum = jnp.sum(w * x, axis=-1, keepdims=True)                        # (TB, 1)

    loss = lse - wsum                                                    # (TB, 1)

    # Mask rows belonging to the (unpadded) boundary block — must be kept now
    # that the wrapper no longer pads, since those rows hold unspecified data.
    row_ids = pid * block_rows + lax.broadcasted_iota(
        jnp.int32, (block_rows, 1), 0)
    loss = jnp.where(row_ids < total_rows, loss, 0.0)

    # Per-tile partial sum, written lane-dense; final /B happens in the wrapper.
    tile_sum = jnp.sum(loss, keepdims=True)                              # (1, 1)
    out_ref[...] = jnp.broadcast_to(tile_sum.reshape(1, 1, 1), out_ref.shape)


def label_smoothing_loss(x, target, smoothing=0.1, block_rows=None):
    """x: (B, C) float logits, target: (B,) int class indices. Returns scalar."""
    B, C = x.shape
    target2d = target.astype(jnp.int32).reshape(B, 1)
    itemsize = jnp.dtype(x.dtype).itemsize

    # Byte-sized batch tile: ~4 MiB of logits per tile (amortizes the ~0.35 us
    # per-grid-step overhead for any C, fits every generation's VMEM budget).
    if block_rows is None:
        bytes_target = 4 * 1024 * 1024
        block_rows = max(8, (bytes_target // (C * itemsize)) // 8 * 8)
    block_rows = max(8, (int(block_rows) // 8) * 8)
    # Never much bigger than the batch itself.
    block_rows = min(block_rows, ((B + 7) // 8) * 8)
    # Ensure >= 2 grid steps when B allows, so v7x shards across both TCs.
    if B > 8:
        block_rows = min(block_rows, max(8, ((B - 1) // 8) * 8))

    grid = pl.cdiv(B, block_rows)

    # Explicit VMEM budget: 2x double-buffered logits tile, 2x lane-padded
    # target tile, output, plus a few f32 full-tile temporaries + headroom.
    x_tile_bytes = block_rows * C * itemsize
    f32_tile_bytes = block_rows * C * 4
    tgt_tile_bytes = block_rows * 128 * 4
    out_tile_bytes = 8 * 128 * 4
    vmem_bytes = (2 * x_tile_bytes + 2 * tgt_tile_bytes + 2 * out_tile_bytes
                  + 4 * f32_tile_bytes + (2 << 20))
    vmem_bytes = int(min(max(vmem_bytes, 16 << 20), 48 << 20))

    kernel = functools.partial(
        _label_smoothing_kernel,
        smoothing=float(smoothing), num_classes=C,
        block_rows=block_rows, total_rows=B)

    partial = pl.pallas_call(
        kernel,
        out_shape=jax.ShapeDtypeStruct((grid, 8, 128), jnp.float32),
        grid_spec=pltpu.PrefetchScalarGridSpec(
            num_scalar_prefetch=0,
            grid=(grid,),
            in_specs=[
                pl.BlockSpec((block_rows, C), lambda i: (i, 0)),   # logits tile
                pl.BlockSpec((block_rows, 1), lambda i: (i, 0)),   # targets tile
            ],
            out_specs=pl.BlockSpec((1, 8, 128), lambda i: (i, 0, 0)),
        ),
        compiler_params=pltpu.CompilerParams(
            dimension_semantics=("parallel",),      # megacore sharding on v7x
            vmem_limit_bytes=vmem_bytes),
    )(x, target2d)

    return jnp.sum(partial[:, 0, 0]) / B


def _reference(x, target, smoothing=0.1):
    confidence = 1.0 - smoothing
    logprobs = jax.nn.log_softmax(x.astype(jnp.float32), axis=-1)
    nll = -jnp.take_along_axis(
        logprobs, target[:, None].astype(jnp.int32), axis=-1)[:, 0]
    smooth = -jnp.mean(logprobs, axis=-1)
    return jnp.mean(confidence * nll + smoothing * smooth)


if __name__ == "__main__":
    key = jax.random.PRNGKey(0)
    kx, kt = jax.random.split(key)
    smoothing = 0.1

    # Case 1: small lane-aligned batch (single tile).
    B, C = 8, 128
    x = jax.random.normal(kx, (B, C), dtype=jnp.float32)
    target = jax.random.randint(kt, (B,), 0, C, dtype=jnp.int32)
    loss = jax.block_until_ready(label_smoothing_loss(x, target, smoothing))
    ref = jax.block_until_ready(_reference(x, target, smoothing))
    assert jnp.allclose(loss, ref, rtol=1e-4, atol=1e-5), (loss, ref)

    # Case 2: ragged batch, explicit small tile -> 3-step grid with an
    # un-padded boundary block (exercises the in-kernel row mask).
    B2, C2 = 20, 128
    x2 = jax.random.normal(kx, (B2, C2), dtype=jnp.float32)
    target2 = jax.random.randint(kt, (B2,), 0, C2, dtype=jnp.int32)
    loss2 = jax.block_until_ready(
        label_smoothing_loss(x2, target2, smoothing, block_rows=8))
    ref2 = jax.block_until_ready(_reference(x2, target2, smoothing))
    assert jnp.allclose(loss2, ref2, rtol=1e-4, atol=1e-5), (loss2, ref2)

    # Case 3: bf16 logits through the native-dtype DMA path, default byte-sized
    # tiling (capped so grid >= 2), ragged boundary block.
    B3, C3 = 20, 256
    x3 = jax.random.normal(kx, (B3, C3), dtype=jnp.bfloat16)
    target3 = jax.random.randint(kt, (B3,), 0, C3, dtype=jnp.int32)
    loss3 = jax.block_until_ready(label_smoothing_loss(x3, target3, smoothing))
    ref3 = jax.block_until_ready(_reference(x3, target3, smoothing))
    assert jnp.allclose(loss3, ref3, rtol=1e-3, atol=1e-3), (loss3, ref3)

    print("KERNEL_OK")
</pallas_src>

<mosaic_0001>
module attributes {stable_mosaic.version = 11 : i64} {
  func.func @_label_smoothing_kernel(%arg0: i32, %arg1: memref<8x128xf32, #tpu.memory_space<vmem>>, %arg2: memref<8x1xi32, #tpu.memory_space<vmem>>, %arg3: memref<1x8x128xf32, #tpu.memory_space<vmem>>) attributes {dimension_semantics = [#tpu.dimension_semantics<parallel>], iteration_bounds = array<i64: 1>, scalar_prefetch = 0 : i64, scratch_operands = 0 : i64, tpu.core_type = #tpu.core_type<tc>, window_params = [{transform_indices = @transform_0, window_bounds = array<i64: 8, 128>}, {transform_indices = @transform_1, window_bounds = array<i64: 8, 1>}, {transform_indices = @transform_2, window_bounds = array<i64: 1, 8, 128>}]} {
    %c0 = arith.constant 0 : index
    %c0_0 = arith.constant 0 : index
    %0 = vector.load %arg1[%c0, %c0_0] : memref<8x128xf32, #tpu.memory_space<vmem>>, vector<8x128xf32>
    %c0_1 = arith.constant 0 : index
    %c0_2 = arith.constant 0 : index
    %1 = vector.load %arg2[%c0_1, %c0_2] : memref<8x1xi32, #tpu.memory_space<vmem>>, vector<8x1xi32>
    %cst = arith.constant dense<0xFF800000> : vector<8xf32>
    %2 = vector.multi_reduction <maximumf>, %0, %cst [1] : vector<8x128xf32> to vector<8xf32>
    %3 = vector.shape_cast %2 : vector<8xf32> to vector<8x1xf32>
    %4 = vector.broadcast %3 : vector<8x1xf32> to vector<8x128xf32>
    %5 = arith.subf %0, %4 : vector<8x128xf32>
    %6 = math.exp %5 : vector<8x128xf32>
    %cst_3 = arith.constant dense<0.000000e+00> : vector<8xf32>
    %7 = vector.multi_reduction <add>, %6, %cst_3 [1] : vector<8x128xf32> to vector<8xf32>
    %8 = vector.shape_cast %7 : vector<8xf32> to vector<8x1xf32>
    %9 = math.log %8 : vector<8x1xf32>
    %10 = arith.addf %3, %9 : vector<8x1xf32>
    %11 = tpu.iota {dimensions = array<i32: 1>} : vector<8x128xi32>
    %12 = vector.broadcast %1 : vector<8x1xi32> to vector<8x128xi32>
    %13 = arith.cmpi eq, %11, %12 : vector<8x128xi32>
    %cst_4 = arith.constant 0.900781273 : f32
    %cst_5 = arith.constant 7.812500e-04 : f32
    %14 = vector.broadcast %cst_4 : f32 to vector<8x128xf32>
    %15 = vector.broadcast %cst_5 : f32 to vector<8x128xf32>
    %16 = arith.select %13, %14, %15 : vector<8x128xi1>, vector<8x128xf32>
    %17 = arith.mulf %16, %0 : vector<8x128xf32>
    %cst_6 = arith.constant dense<0.000000e+00> : vector<8xf32>
    %18 = vector.multi_reduction <add>, %17, %cst_6 [1] : vector<8x128xf32> to vector<8xf32>
    %19 = vector.shape_cast %18 : vector<8xf32> to vector<8x1xf32>
    %20 = arith.subf %10, %19 : vector<8x1xf32>
    %c8_i32 = arith.constant 8 : i32
    %21 = arith.muli %arg0, %c8_i32 : i32
    %22 = tpu.iota {dimensions = array<i32: 0>} : vector<8x1xi32>
    %23 = vector.broadcast %21 : i32 to vector<8x1xi32>
    %24 = arith.addi %23, %22 : vector<8x1xi32>
    %c8_i32_7 = arith.constant 8 : i32
    %25 = vector.broadcast %c8_i32_7 : i32 to vector<8x1xi32>
    %26 = arith.cmpi slt, %24, %25 : vector<8x1xi32>
    %cst_8 = arith.constant 0.000000e+00 : f32
    %27 = vector.broadcast %cst_8 : f32 to vector<8x1xf32>
    %28 = arith.select %26, %20, %27 : vector<8x1xi1>, vector<8x1xf32>
    %29 = vector.shape_cast %28 : vector<8x1xf32> to vector<1x8x1xf32>
    %cst_9 = arith.constant dense<0.000000e+00> : vector<1xf32>
    %30 = vector.multi_reduction <add>, %29, %cst_9 [1, 2] : vector<1x8x1xf32> to vector<1xf32>
    %31 = vector.shape_cast %30 : vector<1xf32> to vector<1x1x1xf32>
    %32 = vector.extract %31[0, 0, 0] : f32 from vector<1x1x1xf32>
    %33 = vector.broadcast %32 : f32 to vector<1x1xf32>
    %34 = vector.shape_cast %33 : vector<1x1xf32> to vector<1x1x1xf32>
    %35 = vector.shape_cast %34 : vector<1x1x1xf32> to vector<1x1x1xf32>
    %36 = vector.broadcast %35 : vector<1x1x1xf32> to vector<1x8x128xf32>
    %c0_10 = arith.constant 0 : index
    %c0_11 = arith.constant 0 : index
    %c0_12 = arith.constant 0 : index
    %37 = vector.load %arg3[%c0_10, %c0_11, %c0_12] : memref<1x8x128xf32, #tpu.memory_space<vmem>>, vector<1x8x128xf32>
    tpu.vector_store %arg3[%c0_10, %c0_11, %c0_12], %36 {strides = array<i32>} : memref<1x8x128xf32, #tpu.memory_space<vmem>>, vector<1x8x128xf32>,
    return
  }
  func.func @transform_0(%arg0: i32) -> (i32, i32) {
    %c0_i32 = arith.constant 0 : i32
    %c0_i32_0 = arith.constant 0 : i32
    return %arg0, %c0_i32 : i32, i32
  }
  func.func @transform_1(%arg0: i32) -> (i32, i32) {
    %c0_i32 = arith.constant 0 : i32
    %c0_i32_0 = arith.constant 0 : i32
    return %arg0, %c0_i32 : i32, i32
  }
  func.func @transform_2(%arg0: i32) -> (i32, i32, i32) {
    %c0_i32 = arith.constant 0 : i32
    %c0_i32_0 = arith.constant 0 : i32
    %c0_i32_1 = arith.constant 0 : i32
    return %arg0, %c0_i32, %c0_i32_0 : i32, i32, i32
  }
}

</mosaic_0001>

<llo_original>
// kernel: tpu_custom_call.1
$region0: #{tpu_custom_call.1}
  #allocation0 [shape = 'u32[]', space=smem, size = 0x4, offset = 0x4, fixed_abs, tag = 'smem constant byte address 0x4 - core index']
  #allocation1 [shape = 'u32[72,128]{1,0:T(1,128)}', space=vmem, size = 0x9000, scoped, tag = 'internal scratch']
  %s0 = inlined_call_operand.vmem [shape: f32[8,128], index: 0, kind: input, shape index: {}]
  %s1 = inlined_call_operand.vmem [shape: s32[8,1], index: 1, kind: input, shape index: {}]
  %s2 = inlined_call_operand.hbm [shape: f32[1,8,128], index: 2, kind: output, shape index: {}]
  %s3 = sld [smem:[#allocation0]]
  $region18: #{tpu_custom_call.1} parent=0
    _
  %s5 = ssub.s32 1, %s3
  %s6 = scalar_select 0, %s5, %s3
  $region1: #{tpu_custom_call.1} parent=0
    #allocation2 [shape = 'u8[4096]{0}', space=vmem, size = 0x1000, scoped, tag = 'output window, operand 0, single buffered']
    #allocation3 [shape = 's32[1]{0}', space=sflag, size = 0x4, scoped, tag = 'scoped memory for tpu_custom_call.1']
    %7 = vsyncpa [#allocation3], 0
    // Predicated region
    $region2: #{tpu_custom_call.1} parent=1 // pred_check
      _
    $region3: #{tpu_custom_call.1} parent=1 // pred_check_branch
      %9 = sbr.rel (0) target = $region5
    $region4: #{tpu_custom_call.1} parent=1 // pred_region
      _
    $region5: #{tpu_custom_call.1} parent=1 // pred_fallthru
      _
    // Predicated region
    $region6: #{tpu_custom_call.1} parent=1 // pred_check
      _
    $region7: #{tpu_custom_call.1} parent=1 // pred_check_branch
      %11 = sbr.rel (0) target = $region9
    $region8: #{tpu_custom_call.1} parent=1 // pred_region
      _
    $region9: #{tpu_custom_call.1} parent=1 // pred_fallthru
      _
    %v12 = vld [vmem:[%s0] sm:$0xff]
    %v13 = vld [vmem:[%s1] sm:$0xff]
    %14 = vmax.xlane.f32.xlu0 %v12
    %v15 = vpop.xlane.xlu0 %14
    %v16 = vsub.f32 %v12, %v15
    %v17 = vmul.f32 %v16, 1.442695
    %v18 = vpow.pop %v17
    %19 = vadd.xlane.f32.xlu0 %v18
    %v20 = vpop.xlane.xlu0 %19
    %v21 = vlog2.pop %v20
    %v22 = vmul.f32 %v21, 0.6931472
    %v23 = vadd.f32 %v15, %v22
    %v24 = vlaneseq
    %v25 = vand.u32 %v24, 127
    %26 = vset.pattern.permute.xlu0 0
    %27 = vperm.xlu0 %26, %v13
    %v28 = vpop.permute.xlu0 %27
    %vm29 = vcmp.eq.s32.totalorder %v25, %v28
    %v30 = vsel %vm29, 0.9007813, 0.00078125
    %v31 = vmul.f32 %v30, %v12
    %32 = vadd.xlane.f32.xlu0 %v31
    %v33 = vpop.xlane.xlu0 %32
    %v34 = vsub.f32 %v23, %v33
    %s35 = smul.u32 0, 8
    %v36 = vlaneseq
    %v37 = vshrl.u32 %v36, 7
    %v38 = vstv %s35
    %v39 = vadd.s32 %v38, %v37
    %vm40 = vcmp.lt.s32.totalorder %v39, 8
    %v41 = vsel %vm40, %v34, 0.0
    %vm42 = vcmask 7168
    %v43 = vsel %vm42, %v41, 0.0
    %44 = vadd.xlane.f32.xlu0 %v43
    %v45 = vpop.xlane.xlu0 %44
    %v46 = vrot.slane %v45, 4
    %v47 = vadd.f32 %v45, %v46
    %v48 = vrot.slane %v47, 2
    %v49 = vadd.f32 %v47, %v48
    %v50 = vrot.slane %v49, 1
    %v51 = vadd.f32 %v49, %v50
    %s52 = vtos %v51
    %v53 = vstv %s52
    %54 = vst [vmem:[#allocation2] sm:$0xff] %v53
    // Predicated region
    $region10: #{tpu_custom_call.1} parent=1 // pred_check
      _
    $region11: #{tpu_custom_call.1} parent=1 // pred_check_branch
      %56 = sbr.rel (0) target = $region13
    $region12: #{tpu_custom_call.1} parent=1 // pred_region
      %58 = vsyncadd [#allocation3], 0
      %s60 = sshll.u32 [#allocation2], 4
      %s61 = int_to_ptr.vmem [resolvable:$true] %s60
      %s62 = sshll.u32 %s2, 4
      %s63 = int_to_ptr.hbm [resolvable:$true] %s62
      %65 = dma.vmem_to_hbm [thread:$0]  %s61, 128, %s63, [#allocation3]
    $region13: #{tpu_custom_call.1} parent=1 // pred_fallthru
      _
    // Predicated region
    $region14: #{tpu_custom_call.1} parent=1 // pred_check
      _
    $region15: #{tpu_custom_call.1} parent=1 // pred_check_branch
      %67 = sbr.rel (0) target = $region17
    $region16: #{tpu_custom_call.1} parent=1 // pred_region
      %69 = dma.done [#allocation3], 128
    $region17: #{tpu_custom_call.1} parent=1 // pred_fallthru
      _
    %70 = vsyncpa [#allocation3], 1

</llo_original>
